<compile_context>
chip_gen: v5e
topology: v5e:2x2
jax: 0.10.0
libtpu: 0.0.40
codegen_flags: <defaults>
</compile_context>

<pallas_src>
import functools

import jax
import jax.numpy as jnp
from jax import lax
from jax.experimental import pallas as pl
from jax.experimental.pallas import tpu as pltpu


def ada_lista_fused_kernel(params_ref, w1_ref, w2_ref, a_ref, at_ref,
                           xt_ref, yt_ref, o_ref, *, layers):
    # params_ref (SMEM, f32[2*layers]): [ss_0, th_0, ss_1, th_1, ...]
    W1 = w1_ref[0]      # (D, D)
    W2 = w2_ref[0]      # (D, D)
    A = a_ref[...]      # (B, D, N)
    At = at_ref[...]    # (B, N, D)
    Xt = xt_ref[...]    # (B, K, N)  lane-dense carry (N in lanes)
    Yt = yt_ref[...]    # (B, K, D)

    # ---- Layer-invariant work, computed once per kernel ------------------
    # G = W1^T W1  (D, D), symmetric.
    G = jnp.einsum('di,dj->ij', W1, W1, preferred_element_type=jnp.float32)
    # (W2 Y)^T per batch element: (B, K, D).  W2 and Y do not change across
    # layers, so this matmul is hoisted out of the layer loop.
    w2yT = jnp.einsum('bkd,ed->bke', Yt, W2, preferred_element_type=jnp.float32)

    # ---- Fused layer loop (static unroll, `layers` is a Python int) ------
    # Re-associated (Gram-free) update:
    #   h^T = X^T + ss * ((W2 Y)^T - (A X)^T G) A
    for l in range(layers):
        ss = params_ref[2 * l]
        th = params_ref[2 * l + 1]
        # (A X)^T = X^T A^T : (B, K, D)   -- plain (m,k)x(k,n) matmul
        axT = jnp.einsum('bkn,bnd->bkd', Xt, At,
                         preferred_element_type=jnp.float32)
        # (G A X)^T = (A X)^T G  (G symmetric) : (B, K, D), shared operand G
        gaxT = jnp.einsum('bkd,de->bke', axT, G,
                          preferred_element_type=jnp.float32)
        u = ss * (w2yT - gaxT)                      # (B, K, D)
        # hidden^T = X^T + u A : (B, K, N)
        hT = Xt + jnp.einsum('bkd,bdn->bkn', u, A,
                             preferred_element_type=jnp.float32)
        # soft threshold: sign(h)*relu(|h|-th) == h - clip(h, -th, th)
        Xt = hT - jnp.clip(hT, -th, th)

    o_ref[...] = Xt


def ada_lista_forward(A, X, Y, W1, W2, step_sizes, thresholds):
    """Run `len(step_sizes)` AdaLISTA layers in a single pallas_call.

    A: (B, D, N), X: (B, N, K), Y: (B, D, K), W1/W2: (1, D, D).
    Returns the updated X of shape (B, N, K).
    """
    B, D, N = A.shape
    K = X.shape[-1]
    L = len(step_sizes)

    params = jnp.stack(
        [jnp.asarray(step_sizes, jnp.float32),
         jnp.asarray(thresholds, jnp.float32)], axis=1).reshape(-1)  # (2L,)

    # Host-side layout plumbing (once): lane-dense carries + A^T.
    At = jnp.swapaxes(A, 1, 2)   # (B, N, D)
    Xt = jnp.swapaxes(X, 1, 2)   # (B, K, N)
    Yt = jnp.swapaxes(Y, 1, 2)   # (B, K, D)

    flops = (2 * L * B * K * (N * D + D * D + D * N)   # per-layer matmuls
             + 2 * D * D * D + 2 * B * K * D * D)      # hoisted G, W2 Y
    bytes_accessed = 4 * (params.size + W1.size + W2.size + A.size
                          + At.size + Xt.size + Yt.size + B * K * N)

    out_t = pl.pallas_call(
        functools.partial(ada_lista_fused_kernel, layers=L),
        out_shape=jax.ShapeDtypeStruct((B, K, N), jnp.float32),
        in_specs=[
            pl.BlockSpec(memory_space=pltpu.SMEM),   # [ss_l, th_l] params
            pl.BlockSpec(memory_space=pltpu.VMEM),   # W1 (1, D, D)
            pl.BlockSpec(memory_space=pltpu.VMEM),   # W2 (1, D, D)
            pl.BlockSpec(memory_space=pltpu.VMEM),   # A  (B, D, N)
            pl.BlockSpec(memory_space=pltpu.VMEM),   # At (B, N, D)
            pl.BlockSpec(memory_space=pltpu.VMEM),   # Xt (B, K, N)
            pl.BlockSpec(memory_space=pltpu.VMEM),   # Yt (B, K, D)
        ],
        out_specs=pl.BlockSpec(memory_space=pltpu.VMEM),
        cost_estimate=pl.CostEstimate(flops=flops, transcendentals=0,
                                      bytes_accessed=bytes_accessed),
    )(params, W1, W2, A, At, Xt, Yt)

    return jnp.swapaxes(out_t, 1, 2)   # back to (B, N, K)


def ada_lista_reference(A, X, Y, W1, W2, step_sizes, thresholds):
    # Faithful (Gram-matrix) form of the PyTorch forward, applied per layer.
    hp = lax.Precision.HIGHEST
    for ss, th in zip(step_sizes, thresholds):
        w1a = jnp.matmul(W1, A, precision=hp)                          # (B,D,N)
        mat1 = jnp.matmul(jnp.swapaxes(w1a, 1, 2), w1a, precision=hp)  # (B,N,N)
        mat2 = jnp.matmul(jnp.swapaxes(A, 1, 2), W2, precision=hp)     # (B,N,D)
        hidden = (X
                  - ss * jnp.matmul(mat1, X, precision=hp)
                  + ss * jnp.matmul(mat2, Y, precision=hp))
        X = jnp.sign(hidden) * jnp.maximum(jnp.abs(hidden) - th, 0.0)
    return X


if __name__ == "__main__":
    # Module config (small, consistent with AdaLISTA(layers, input_dim, output_dim)):
    layers = 3
    input_dim = 32    # N: dimension of sparse code X
    output_dim = 16   # D: dimension of measurements Y (and of W1/W2)
    B = 2             # batch of optimization problems
    K = 8             # samples per problem

    # Deterministic parameter init (matches nn.Module __init__):
    W1 = jnp.eye(output_dim, dtype=jnp.float32)[None]   # (1, D, D)
    W2 = jnp.eye(output_dim, dtype=jnp.float32)[None]   # (1, D, D)
    Lconst = 5.0
    step_sizes = [1.0 / Lconst] * layers
    thresholds = [1.0 / Lconst] * layers

    # Deterministic inputs (optimizees.W / .X / .Y):
    key = jax.random.PRNGKey(0)
    kA, kX, kY = jax.random.split(key, 3)
    A = jax.random.normal(kA, (B, output_dim, input_dim), dtype=jnp.float32)
    # Unit-norm dictionary columns (standard LASSO/LISTA convention) so the
    # 3-layer iteration at step size 1/L stays well-conditioned.
    A = A / jnp.linalg.norm(A, axis=1, keepdims=True)
    X = jax.random.normal(kX, (B, input_dim, K), dtype=jnp.float32)
    Y = jax.random.normal(kY, (B, output_dim, K), dtype=jnp.float32)

    out = ada_lista_forward(A, X, Y, W1, W2, step_sizes, thresholds)
    out = jax.block_until_ready(out)

    ref = ada_lista_reference(A, X, Y, W1, W2, step_sizes, thresholds)
    assert out.shape == (B, input_dim, K)
    # Tolerance accounts for the re-associated (Gram-free) rounding order
    # across the 3 fused layers.
    assert jnp.allclose(out, ref, atol=1e-4, rtol=1e-4), "mismatch vs JAX reference"

    print("KERNEL_OK")
</pallas_src>

<mosaic_0001>
module attributes {stable_mosaic.version = 11 : i64} {
  func.func @ada_lista_fused_kernel(%arg0: memref<6xf32, #tpu.memory_space<smem>>, %arg1: memref<1x16x16xf32, #tpu.memory_space<vmem>>, %arg2: memref<1x16x16xf32, #tpu.memory_space<vmem>>, %arg3: memref<2x16x32xf32, #tpu.memory_space<vmem>>, %arg4: memref<2x32x16xf32, #tpu.memory_space<vmem>>, %arg5: memref<2x8x32xf32, #tpu.memory_space<vmem>>, %arg6: memref<2x8x16xf32, #tpu.memory_space<vmem>>, %arg7: memref<2x8x32xf32, #tpu.memory_space<vmem>>) attributes {dimension_semantics = [], scalar_prefetch = 0 : i64, scratch_operands = 0 : i64, tpu.core_type = #tpu.core_type<tc>} {
    %c0 = arith.constant 0 : index
    %c0_0 = arith.constant 0 : index
    %c0_1 = arith.constant 0 : index
    %0 = vector.load %arg1[%c0, %c0_0, %c0_1] : memref<1x16x16xf32, #tpu.memory_space<vmem>>, vector<1x16x16xf32>
    %1 = vector.shape_cast %0 : vector<1x16x16xf32> to vector<16x16xf32>
    %c0_2 = arith.constant 0 : index
    %c0_3 = arith.constant 0 : index
    %c0_4 = arith.constant 0 : index
    %2 = vector.load %arg2[%c0_2, %c0_3, %c0_4] : memref<1x16x16xf32, #tpu.memory_space<vmem>>, vector<1x16x16xf32>
    %3 = vector.shape_cast %2 : vector<1x16x16xf32> to vector<16x16xf32>
    %c0_5 = arith.constant 0 : index
    %c0_6 = arith.constant 0 : index
    %c0_7 = arith.constant 0 : index
    %4 = vector.load %arg3[%c0_5, %c0_6, %c0_7] : memref<2x16x32xf32, #tpu.memory_space<vmem>>, vector<2x16x32xf32>
    %c0_8 = arith.constant 0 : index
    %c0_9 = arith.constant 0 : index
    %c0_10 = arith.constant 0 : index
    %5 = vector.load %arg4[%c0_8, %c0_9, %c0_10] : memref<2x32x16xf32, #tpu.memory_space<vmem>>, vector<2x32x16xf32>
    %c0_11 = arith.constant 0 : index
    %c0_12 = arith.constant 0 : index
    %c0_13 = arith.constant 0 : index
    %6 = vector.load %arg5[%c0_11, %c0_12, %c0_13] : memref<2x8x32xf32, #tpu.memory_space<vmem>>, vector<2x8x32xf32>
    %c0_14 = arith.constant 0 : index
    %c0_15 = arith.constant 0 : index
    %c0_16 = arith.constant 0 : index
    %7 = vector.load %arg6[%c0_14, %c0_15, %c0_16] : memref<2x8x16xf32, #tpu.memory_space<vmem>>, vector<2x8x16xf32>
    "tpu.trace_start"() <{level = 10 : i32, message = "di,dj->ij"}> : () -> ()
    %cst = arith.constant dense<0.000000e+00> : vector<16x16xf32>
    %8 = tpu.matmul %1, %1, %cst {dimension_numbers = #tpu.dot_dimension_numbers<[0], [0], [1], [1], [0, 1, 1, 1], [], []>} : vector<16x16xf32>, vector<16x16xf32>, vector<16x16xf32> -> vector<16x16xf32>
    "tpu.trace_stop"() : () -> ()
    "tpu.trace_start"() <{level = 10 : i32, message = "bkd,ed->bke"}> : () -> ()
    %cst_17 = arith.constant dense<0.000000e+00> : vector<2x8x16xf32>
    %9 = tpu.matmul %7, %3, %cst_17 {dimension_numbers = #tpu.dot_dimension_numbers<[2], [1], [0, 1], [0], [0, 0, 0, 1, 1, 0], [], []>} : vector<2x8x16xf32>, vector<16x16xf32>, vector<2x8x16xf32> -> vector<2x8x16xf32>
    "tpu.trace_stop"() : () -> ()
    %c0_18 = arith.constant 0 : index
    %10 = memref.load %arg0[%c0_18] : memref<6xf32, #tpu.memory_space<smem>>
    %c1 = arith.constant 1 : index
    %11 = memref.load %arg0[%c1] : memref<6xf32, #tpu.memory_space<smem>>
    "tpu.trace_start"() <{level = 10 : i32, message = "bkn,bnd->bkd"}> : () -> ()
    %cst_19 = arith.constant dense<0.000000e+00> : vector<2x8x16xf32>
    %12 = tpu.matmul %6, %5, %cst_19 {dimension_numbers = #tpu.dot_dimension_numbers<[2], [1], [1], [2], [0, 0, 0, 1, 1, 2], [0], [0]>} : vector<2x8x32xf32>, vector<2x32x16xf32>, vector<2x8x16xf32> -> vector<2x8x16xf32>
    "tpu.trace_stop"() : () -> ()
    "tpu.trace_start"() <{level = 10 : i32, message = "bkd,de->bke"}> : () -> ()
    %cst_20 = arith.constant dense<0.000000e+00> : vector<2x8x16xf32>
    %13 = tpu.matmul %12, %8, %cst_20 {dimension_numbers = #tpu.dot_dimension_numbers<[2], [0], [0, 1], [1], [0, 0, 0, 1, 1, 1], [], []>} : vector<2x8x16xf32>, vector<16x16xf32>, vector<2x8x16xf32> -> vector<2x8x16xf32>
    "tpu.trace_stop"() : () -> ()
    %14 = arith.subf %9, %13 : vector<2x8x16xf32>
    %15 = vector.broadcast %10 : f32 to vector<2x8x16xf32>
    %16 = arith.mulf %15, %14 : vector<2x8x16xf32>
    "tpu.trace_start"() <{level = 10 : i32, message = "bkd,bdn->bkn"}> : () -> ()
    %cst_21 = arith.constant dense<0.000000e+00> : vector<2x8x32xf32>
    %17 = tpu.matmul %16, %4, %cst_21 {dimension_numbers = #tpu.dot_dimension_numbers<[2], [1], [1], [2], [0, 0, 0, 1, 1, 2], [0], [0]>} : vector<2x8x16xf32>, vector<2x16x32xf32>, vector<2x8x32xf32> -> vector<2x8x32xf32>
    "tpu.trace_stop"() : () -> ()
    %18 = arith.addf %6, %17 : vector<2x8x32xf32>
    %cst_22 = arith.constant 0.000000e+00 : f32
    %19 = arith.subf %cst_22, %11 : f32
    %20 = vector.broadcast %19 : f32 to vector<2x8x32xf32>
    %21 = arith.maximumf %20, %18 : vector<2x8x32xf32>
    %22 = vector.broadcast %11 : f32 to vector<2x8x32xf32>
    %23 = arith.minimumf %22, %21 : vector<2x8x32xf32>
    %24 = arith.subf %18, %23 : vector<2x8x32xf32>
    %c2 = arith.constant 2 : index
    %25 = memref.load %arg0[%c2] : memref<6xf32, #tpu.memory_space<smem>>
    %c3 = arith.constant 3 : index
    %26 = memref.load %arg0[%c3] : memref<6xf32, #tpu.memory_space<smem>>
    "tpu.trace_start"() <{level = 10 : i32, message = "bkn,bnd->bkd"}> : () -> ()
    %cst_23 = arith.constant dense<0.000000e+00> : vector<2x8x16xf32>
    %27 = tpu.matmul %24, %5, %cst_23 {dimension_numbers = #tpu.dot_dimension_numbers<[2], [1], [1], [2], [0, 0, 0, 1, 1, 2], [0], [0]>} : vector<2x8x32xf32>, vector<2x32x16xf32>, vector<2x8x16xf32> -> vector<2x8x16xf32>
    "tpu.trace_stop"() : () -> ()
    "tpu.trace_start"() <{level = 10 : i32, message = "bkd,de->bke"}> : () -> ()
    %cst_24 = arith.constant dense<0.000000e+00> : vector<2x8x16xf32>
    %28 = tpu.matmul %27, %8, %cst_24 {dimension_numbers = #tpu.dot_dimension_numbers<[2], [0], [0, 1], [1], [0, 0, 0, 1, 1, 1], [], []>} : vector<2x8x16xf32>, vector<16x16xf32>, vector<2x8x16xf32> -> vector<2x8x16xf32>
    "tpu.trace_stop"() : () -> ()
    %29 = arith.subf %9, %28 : vector<2x8x16xf32>
    %30 = vector.broadcast %25 : f32 to vector<2x8x16xf32>
    %31 = arith.mulf %30, %29 : vector<2x8x16xf32>
    "tpu.trace_start"() <{level = 10 : i32, message = "bkd,bdn->bkn"}> : () -> ()
    %cst_25 = arith.constant dense<0.000000e+00> : vector<2x8x32xf32>
    %32 = tpu.matmul %31, %4, %cst_25 {dimension_numbers = #tpu.dot_dimension_numbers<[2], [1], [1], [2], [0, 0, 0, 1, 1, 2], [0], [0]>} : vector<2x8x16xf32>, vector<2x16x32xf32>, vector<2x8x32xf32> -> vector<2x8x32xf32>
    "tpu.trace_stop"() : () -> ()
    %33 = arith.addf %24, %32 : vector<2x8x32xf32>
    %cst_26 = arith.constant 0.000000e+00 : f32
    %34 = arith.subf %cst_26, %26 : f32
    %35 = vector.broadcast %34 : f32 to vector<2x8x32xf32>
    %36 = arith.maximumf %35, %33 : vector<2x8x32xf32>
    %37 = vector.broadcast %26 : f32 to vector<2x8x32xf32>
    %38 = arith.minimumf %37, %36 : vector<2x8x32xf32>
    %39 = arith.subf %33, %38 : vector<2x8x32xf32>
    %c4 = arith.constant 4 : index
    %40 = memref.load %arg0[%c4] : memref<6xf32, #tpu.memory_space<smem>>
    %c5 = arith.constant 5 : index
    %41 = memref.load %arg0[%c5] : memref<6xf32, #tpu.memory_space<smem>>
    "tpu.trace_start"() <{level = 10 : i32, message = "bkn,bnd->bkd"}> : () -> ()
    %cst_27 = arith.constant dense<0.000000e+00> : vector<2x8x16xf32>
    %42 = tpu.matmul %39, %5, %cst_27 {dimension_numbers = #tpu.dot_dimension_numbers<[2], [1], [1], [2], [0, 0, 0, 1, 1, 2], [0], [0]>} : vector<2x8x32xf32>, vector<2x32x16xf32>, vector<2x8x16xf32> -> vector<2x8x16xf32>
    "tpu.trace_stop"() : () -> ()
    "tpu.trace_start"() <{level = 10 : i32, message = "bkd,de->bke"}> : () -> ()
    %cst_28 = arith.constant dense<0.000000e+00> : vector<2x8x16xf32>
    %43 = tpu.matmul %42, %8, %cst_28 {dimension_numbers = #tpu.dot_dimension_numbers<[2], [0], [0, 1], [1], [0, 0, 0, 1, 1, 1], [], []>} : vector<2x8x16xf32>, vector<16x16xf32>, vector<2x8x16xf32> -> vector<2x8x16xf32>
    "tpu.trace_stop"() : () -> ()
    %44 = arith.subf %9, %43 : vector<2x8x16xf32>
    %45 = vector.broadcast %40 : f32 to vector<2x8x16xf32>
    %46 = arith.mulf %45, %44 : vector<2x8x16xf32>
    "tpu.trace_start"() <{level = 10 : i32, message = "bkd,bdn->bkn"}> : () -> ()
    %cst_29 = arith.constant dense<0.000000e+00> : vector<2x8x32xf32>
    %47 = tpu.matmul %46, %4, %cst_29 {dimension_numbers = #tpu.dot_dimension_numbers<[2], [1], [1], [2], [0, 0, 0, 1, 1, 2], [0], [0]>} : vector<2x8x16xf32>, vector<2x16x32xf32>, vector<2x8x32xf32> -> vector<2x8x32xf32>
    "tpu.trace_stop"() : () -> ()
    %48 = arith.addf %39, %47 : vector<2x8x32xf32>
    %cst_30 = arith.constant 0.000000e+00 : f32
    %49 = arith.subf %cst_30, %41 : f32
    %50 = vector.broadcast %49 : f32 to vector<2x8x32xf32>
    %51 = arith.maximumf %50, %48 : vector<2x8x32xf32>
    %52 = vector.broadcast %41 : f32 to vector<2x8x32xf32>
    %53 = arith.minimumf %52, %51 : vector<2x8x32xf32>
    %54 = arith.subf %48, %53 : vector<2x8x32xf32>
    %c0_31 = arith.constant 0 : index
    %c0_32 = arith.constant 0 : index
    %c0_33 = arith.constant 0 : index
    %55 = vector.load %arg7[%c0_31, %c0_32, %c0_33] : memref<2x8x32xf32, #tpu.memory_space<vmem>>, vector<2x8x32xf32>
    tpu.vector_store %arg7[%c0_31, %c0_32, %c0_33], %54 {strides = array<i32>} : memref<2x8x32xf32, #tpu.memory_space<vmem>>, vector<2x8x32xf32>,
    return
  }
}

</mosaic_0001>

<llo_original>
// kernel: tpu_custom_call.1
$region0: #{tpu_custom_call.1}
  #allocation0 [shape = 'u32[]', space=smem, size = 0x4, offset = 0x4, fixed_abs, tag = 'smem constant byte address 0x4 - core index']
  #allocation1 [shape = 'u32[72,128]{1,0:T(1,128)}', space=vmem, size = 0x9000, scoped, tag = 'internal scratch']
  %s0 = inlined_call_operand.hbm [shape: f32[6], index: 0, kind: input, shape index: {}]
  %s1 = inlined_call_operand.vmem [shape: f32[1,16,16], index: 1, kind: input, shape index: {}]
  %s2 = inlined_call_operand.vmem [shape: f32[1,16,16], index: 2, kind: input, shape index: {}]
  %s3 = inlined_call_operand.vmem [shape: f32[2,16,32], index: 3, kind: input, shape index: {}]
  %s4 = inlined_call_operand.vmem [shape: f32[2,32,16], index: 4, kind: input, shape index: {}]
  %s5 = inlined_call_operand.vmem [shape: f32[2,8,32], index: 5, kind: input, shape index: {}]
  %s6 = inlined_call_operand.vmem [shape: f32[2,8,16], index: 6, kind: input, shape index: {}]
  %s7 = inlined_call_operand.hbm [shape: f32[2,8,32], index: 7, kind: output, shape index: {}]
  %s8 = sld [smem:[#allocation0]]
  $region42: #{tpu_custom_call.1} parent=0
    _
  %s10 = ssub.s32 1, %s8
  %s11 = scalar_select 0, %s10, %s8
  $region1: #{tpu_custom_call.1} parent=0
    #allocation2 [shape = 'u8[512]{0}', space=smem, size = 0x200, scoped, tag = 'input window, operand 0, single buffered']
    #allocation3 [shape = 's32[1]{0}', space=sflag, size = 0x4, scoped, tag = 'scoped memory for tpu_custom_call.1']
    #allocation4 [shape = 's32[1]{0}', space=sflag, size = 0x4, scoped, tag = 'scoped memory for tpu_custom_call.1']
    #allocation5 [shape = 'u8[8192]{0}', space=vmem, size = 0x2000, scoped, tag = 'output window, operand 0, single buffered']
    %12 = vsyncpa [#allocation4], 0
    %13 = vsyncpa [#allocation3], 0
    // Predicated region
    $region2: #{tpu_custom_call.1} parent=1 // pred_check
      _
    $region3: #{tpu_custom_call.1} parent=1 // pred_check_branch
      %15 = sbr.rel (0) target = $region5
    $region4: #{tpu_custom_call.1} parent=1 // pred_region
      %17 = vsyncadd [#allocation4], 0
      %s19 = sshll.u32 %s0, 4
      %s20 = int_to_ptr.hbm [resolvable:$true] %s19
      %22 = dma.hbm_to_smem %s20, 16, [#allocation2], [#allocation4]
    $region5: #{tpu_custom_call.1} parent=1 // pred_fallthru
      _
    // Predicated region
    $region6: #{tpu_custom_call.1} parent=1 // pred_check
      _
    $region7: #{tpu_custom_call.1} parent=1 // pred_check_branch
      %24 = sbr.rel (0) target = $region9
    $region8: #{tpu_custom_call.1} parent=1 // pred_region
      _
    $region9: #{tpu_custom_call.1} parent=1 // pred_fallthru
      _
    // Predicated region
    $region10: #{tpu_custom_call.1} parent=1 // pred_check
      _
    $region11: #{tpu_custom_call.1} parent=1 // pred_check_branch
      %26 = sbr.rel (0) target = $region13
    $region12: #{tpu_custom_call.1} parent=1 // pred_region
      _
    $region13: #{tpu_custom_call.1} parent=1 // pred_fallthru
      _
    // Predicated region
    $region14: #{tpu_custom_call.1} parent=1 // pred_check
      _
    $region15: #{tpu_custom_call.1} parent=1 // pred_check_branch
      %28 = sbr.rel (0) target = $region17
    $region16: #{tpu_custom_call.1} parent=1 // pred_region
      _
    $region17: #{tpu_custom_call.1} parent=1 // pred_fallthru
      _
    // Predicated region
    $region18: #{tpu_custom_call.1} parent=1 // pred_check
      _
    $region19: #{tpu_custom_call.1} parent=1 // pred_check_branch
      %30 = sbr.rel (0) target = $region21
    $region20: #{tpu_custom_call.1} parent=1 // pred_region
      _
    $region21: #{tpu_custom_call.1} parent=1 // pred_fallthru
      _
    // Predicated region
    $region22: #{tpu_custom_call.1} parent=1 // pred_check
      _
    $region23: #{tpu_custom_call.1} parent=1 // pred_check_branch
      %32 = sbr.rel (0) target = $region25
    $region24: #{tpu_custom_call.1} parent=1 // pred_region
      _
    $region25: #{tpu_custom_call.1} parent=1 // pred_fallthru
      _
    // Predicated region
    $region26: #{tpu_custom_call.1} parent=1 // pred_check
      _
    $region27: #{tpu_custom_call.1} parent=1 // pred_check_branch
      %34 = sbr.rel (0) target = $region29
    $region28: #{tpu_custom_call.1} parent=1 // pred_region
      _
    $region29: #{tpu_custom_call.1} parent=1 // pred_fallthru
      _
    // Predicated region
    $region30: #{tpu_custom_call.1} parent=1 // pred_check
      _
    $region31: #{tpu_custom_call.1} parent=1 // pred_check_branch
      %36 = sbr.rel (0) target = $region33
    $region32: #{tpu_custom_call.1} parent=1 // pred_region
      %38 = dma.done [#allocation4], 16
    $region33: #{tpu_custom_call.1} parent=1 // pred_fallthru
      _
    %39 = sfence
    %v40 = vld [vmem:[%s1] sm:$0xff]
    %v41 = vld [vmem:[%s1 + $0x8] sm:$0xff]
    %v42 = vld [vmem:[%s2] sm:$0xff]
    %v43 = vld [vmem:[%s2 + $0x8] sm:$0xff]
    %v44 = vld [vmem:[%s3] sm:$0xff]
    %v45 = vld [vmem:[%s3 + $0x8] sm:$0xff]
    %v46 = vld [vmem:[%s3 + $0x10] sm:$0xff]
    %v47 = vld [vmem:[%s3 + $0x18] sm:$0xff]
    %v48 = vld [vmem:[%s4] sm:$0xff]
    %v49 = vld [vmem:[%s4 + $0x8] sm:$0xff]
    %v50 = vld [vmem:[%s4 + $0x10] sm:$0xff]
    %v51 = vld [vmem:[%s4 + $0x18] sm:$0xff]
    %v52 = vld [vmem:[%s4 + $0x20] sm:$0xff]
    %v53 = vld [vmem:[%s4 + $0x28] sm:$0xff]
    %v54 = vld [vmem:[%s4 + $0x30] sm:$0xff]
    %v55 = vld [vmem:[%s4 + $0x38] sm:$0xff]
    %v56 = vld [vmem:[%s5] sm:$0xff]
    %v57 = vld [vmem:[%s5 + $0x8] sm:$0xff]
    %v58 = vld [vmem:[%s6] sm:$0xff]
    %v59 = vld [vmem:[%s6 + $0x8] sm:$0xff]
    %60 = vxpose.xlu0.b32.start [1/16] %v40, 128
    %61 = vxpose.xlu0.b32.cont [2/16] %v41, 128
    %62 = vxpose.xlu0.b32.cont [3/16] 0.0, 128
    %63 = vxpose.xlu0.b32.cont [4/16] 0.0, 128
    %64 = vxpose.xlu0.b32.cont [5/16] 0.0, 128
    %65 = vxpose.xlu0.b32.cont [6/16] 0.0, 128
    %66 = vxpose.xlu0.b32.cont [7/16] 0.0, 128
    %67 = vxpose.xlu0.b32.cont [8/16] 0.0, 128
    %68 = vxpose.xlu0.b32.cont [9/16] 0.0, 128
    %69 = vxpose.xlu0.b32.cont [10/16] 0.0, 128
    %70 = vxpose.xlu0.b32.cont [11/16] 0.0, 128
    %71 = vxpose.xlu0.b32.cont [12/16] 0.0, 128
    %72 = vxpose.xlu0.b32.cont [13/16] 0.0, 128
    %73 = vxpose.xlu0.b32.cont [14/16] 0.0, 128
    %74 = vxpose.xlu0.b32.cont [15/16] 0.0, 128
    %75 = vxpose.xlu0.b32.end [16/16] 0.0, 128
    %v76 = vpop.trf.xlu0
    %v77 = vpop.trf.xlu0
    %v78 = vpop.trf.xlu0
    %v79 = vpop.trf.xlu0
    %v80 = vpop.trf.xlu0
    %v81 = vpop.trf.xlu0
    %v82 = vpop.trf.xlu0
    %v83 = vpop.trf.xlu0
    %v84 = vpop.trf.xlu0
    %v85 = vpop.trf.xlu0
    %v86 = vpop.trf.xlu0
    %v87 = vpop.trf.xlu0
    %v88 = vpop.trf.xlu0
    %v89 = vpop.trf.xlu0
    %v90 = vpop.trf.xlu0
    %v91 = vpop.trf.xlu0
    %vm92 = vcmask 130048
    %v94 = vsel %vm92, %v76, 0
    %v97 = vsel %vm92, %v77, 0
    %99 = vmatpush.msra.mxu0 0.0
    %100 = vmatpush.msra.mxu0 0.0
    %101 = vmatpush.msra.mxu0 0.0
    %102 = vmatpush.msra.mxu0 0.0
    %103 = vmatpush.msra.mxu0 0.0
    %104 = vmatpush.msra.mxu0 0.0
    %105 = vmatpush.msra.mxu0 0.0
    %106 = vmatpush.msra.mxu0 0.0
    %107 = vmatpush.msra.mxu0 0.0
    %108 = vmatpush.msra.mxu0 0.0
    %109 = vmatpush.msra.mxu0 0.0
    %110 = vmatpush.msra.mxu0 0.0
    %111 = vmatpush.msra.mxu0 0.0
    %112 = vmatpush.msra.mxu0 0.0
    %113 = vmatpush.msra.mxu0 %v41
    %114 = vmatpush.msra.mxu0 %v40
    %115 = vmatmul.f32.gmra.mxu0 %v94
    %v116 = vpop.f32.mrf.mxu0
    %v117 = vadd.f32 0.0, %v116
    %118 = vmatmul.f32.gmra.mxu0 %v97
    %v119 = vpop.f32.mrf.mxu0
    %v120 = vadd.f32 0.0, %v119
    %121 = vdwg.mxu0
    %v123 = vsel %vm92, %v58, 0
    %v126 = vsel %vm92, %v59, 0
    %v129 = vsel %vm92, %v42, 0
    %v132 = vsel %vm92, %v43, 0
    %134 = vmatpush.xpose.msra.mxu0 0.0
    %135 = vmatpush.xpose.msra.mxu0 0.0
    %136 = vmatpush.xpose.msra.mxu0 0.0
    %137 = vmatpush.xpose.msra.mxu0 0.0
    %138 = vmatpush.xpose.msra.mxu0 0.0
    %139 = vmatpush.xpose.msra.mxu0 0.0
    %140 = vmatpush.xpose.msra.mxu0 0.0
    %141 = vmatpush.xpose.msra.mxu0 0.0
    %142 = vmatpush.xpose.msra.mxu0 0.0
    %143 = vmatpush.xpose.msra.mxu0 0.0
    %144 = vmatpush.xpose.msra.mxu0 0.0
    %145 = vmatpush.xpose.msra.mxu0 0.0
    %146 = vmatpush.xpose.msra.mxu0 0.0
    %147 = vmatpush.xpose.msra.mxu0 0.0
    %148 = vmatpush.xpose.msra.mxu0 %v132
    %149 = vmatpush.xpose.msra.mxu0 %v129
    %150 = vmatmul.f32.gmra.mxu0 %v123
    %v151 = vpop.f32.mrf.mxu0
    %v152 = vadd.f32 0.0, %v151
    %153 = vmatmul.f32.gmra.mxu0 %v126
    %v154 = vpop.f32.mrf.mxu0
    %v155 = vadd.f32 0.0, %v154
    %156 = vdwg.mxu0
    %s157 = sld [smem:[#allocation2]]
    %s158 = sld [smem:[#allocation2 + $0x1]]
    %vm159 = vcmask 261120
    %v161 = vsel %vm159, %v56, 0
    %163 = vmatpush.msra.mxu0 0.0
    %164 = vmatpush.msra.mxu0 0.0
    %165 = vmatpush.msra.mxu0 0.0
    %166 = vmatpush.msra.mxu0 0.0
    %167 = vmatpush.msra.mxu0 0.0
    %168 = vmatpush.msra.mxu0 0.0
    %169 = vmatpush.msra.mxu0 0.0
    %170 = vmatpush.msra.mxu0 0.0
    %171 = vmatpush.msra.mxu0 0.0
    %172 = vmatpush.msra.mxu0 0.0
    %173 = vmatpush.msra.mxu0 0.0
    %174 = vmatpush.msra.mxu0 0.0
    %175 = vmatpush.msra.mxu0 %v51
    %176 = vmatpush.msra.mxu0 %v50
    %177 = vmatpush.msra.mxu0 %v49
    %178 = vmatpush.msra.mxu0 %v48
    %179 = vmatmul.f32.gmra.mxu0 %v161
    %v180 = vpop.f32.mrf.mxu0
    %v181 = vadd.f32 0.0, %v180
    %182 = vdwg.mxu0
    %v184 = vsel %vm159, %v57, 0
    %186 = vmatpush.msra.mxu0 0.0
    %187 = vmatpush.msra.mxu0 0.0
    %188 = vmatpush.msra.mxu0 0.0
    %189 = vmatpush.msra.mxu0 0.0
    %190 = vmatpush.msra.mxu0 0.0
    %191 = vmatpush.msra.mxu0 0.0
    %192 = vmatpush.msra.mxu0 0.0
    %193 = vmatpush.msra.mxu0 0.0
    %194 = vmatpush.msra.mxu0 0.0
    %195 = vmatpush.msra.mxu0 0.0
    %196 = vmatpush.msra.mxu0 0.0
    %197 = vmatpush.msra.mxu0 0.0
    %198 = vmatpush.msra.mxu0 %v55
    %199 = vmatpush.msra.mxu0 %v54
    %200 = vmatpush.msra.mxu0 %v53
    %201 = vmatpush.msra.mxu0 %v52
    %202 = vmatmul.f32.gmra.mxu0 %v184
    %v203 = vpop.f32.mrf.mxu0
    %v204 = vadd.f32 0.0, %v203
    %205 = vdwg.mxu0
    %v207 = vsel %vm92, %v181, 0
    %v210 = vsel %vm92, %v204, 0
    %212 = vmatpush.msra.mxu0 0.0
    %213 = vmatpush.msra.mxu0 0.0
    %214 = vmatpush.msra.mxu0 0.0
    %215 = vmatpush.msra.mxu0 0.0
    %216 = vmatpush.msra.mxu0 0.0
    %217 = vmatpush.msra.mxu0 0.0
    %218 = vmatpush.msra.mxu0 0.0
    %219 = vmatpush.msra.mxu0 0.0
    %220 = vmatpush.msra.mxu0 0.0
    %221 = vmatpush.msra.mxu0 0.0
    %222 = vmatpush.msra.mxu0 0.0
    %223 = vmatpush.msra.mxu0 0.0
    %224 = vmatpush.msra.mxu0 0.0
    %225 = vmatpush.msra.mxu0 0.0
    %226 = vmatpush.msra.mxu0 %v120
    %227 = vmatpush.msra.mxu0 %v117
    %228 = vmatmul.f32.gmra.mxu0 %v207
    %v229 = vpop.f32.mrf.mxu0
    %v230 = vadd.f32 0.0, %v229
    %231 = vmatmul.f32.gmra.mxu0 %v210
    %v232 = vpop.f32.mrf.mxu0
    %v233 = vadd.f32 0.0, %v232
    %234 = vdwg.mxu0
    %v235 = vsub.f32 %v152, %v230
    %v236 = vsub.f32 %v155, %v233
    %v237 = vstv %s157
    %v238 = vmul.f32 %v237, %v235
    %v239 = vmul.f32 %v237, %v236
    %v241 = vsel %vm92, %v238, 0
    %243 = vmatpush.msra.mxu0 0.0
    %244 = vmatpush.msra.mxu0 0.0
    %245 = vmatpush.msra.mxu0 0.0
    %246 = vmatpush.msra.mxu0 0.0
    %247 = vmatpush.msra.mxu0 0.0
    %248 = vmatpush.msra.mxu0 0.0
    %249 = vmatpush.msra.mxu0 0.0
    %250 = vmatpush.msra.mxu0 0.0
    %251 = vmatpush.msra.mxu0 0.0
    %252 = vmatpush.msra.mxu0 0.0
    %253 = vmatpush.msra.mxu0 0.0
    %254 = vmatpush.msra.mxu0 0.0
    %255 = vmatpush.msra.mxu0 0.0
    %256 = vmatpush.msra.mxu0 0.0
    %257 = vmatpush.msra.mxu0 %v45
    %258 = vmatpush.msra.mxu0 %v44
    %259 = vmatmul.f32.gmra.mxu0 %v241
    %v260 = vpop.f32.mrf.mxu0
    %v261 = vadd.f32 0.0, %v260
    %262 = vdwg.mxu0
    %v264 = vsel %vm92, %v239, 0
    %266 = vmatpush.msra.mxu0 0.0
    %267 = vmatpush.msra.mxu0 0.0
    %268 = vmatpush.msra.mxu0 0.0
    %269 = vmatpush.msra.mxu0 0.0
    %270 = vmatpush.msra.mxu0 0.0
    %271 = vmatpush.msra.mxu0 0.0
    %272 = vmatpush.msra.mxu0 0.0
    %273 = vmatpush.msra.mxu0 0.0
    %274 = vmatpush.msra.mxu0 0.0
    %275 = vmatpush.msra.mxu0 0.0
    %276 = vmatpush.msra.mxu0 0.0
    %277 = vmatpush.msra.mxu0 0.0
    %278 = vmatpush.msra.mxu0 0.0
    %279 = vmatpush.msra.mxu0 0.0
    %280 = vmatpush.msra.mxu0 %v47
    %281 = vmatpush.msra.mxu0 %v46
    %282 = vmatmul.f32.gmra.mxu0 %v264
    %v283 = vpop.f32.mrf.mxu0
    %v284 = vadd.f32 0.0, %v283
    %285 = vdwg.mxu0
    %v286 = vadd.f32 %v56, %v261
    %v287 = vadd.f32 %v57, %v284
    %s288 = ssub.f32 0.0, %s158
    %v289 = vstv %s288
    %v290 = vmax.f32 %v289, %v286
    %v291 = vmax.f32 %v289, %v287
    %v292 = vstv %s158
    %v293 = vmin.f32 %v292, %v290
    %v294 = vmin.f32 %v292, %v291
    %v295 = vsub.f32 %v286, %v293
    %v296 = vsub.f32 %v287, %v294
    %s297 = sld [smem:[#allocation2 + $0x2]]
    %s298 = sld [smem:[#allocation2 + $0x3]]
    %v300 = vsel %vm159, %v295, 0
    %302 = vmatpush.msra.mxu0 0.0
    %303 = vmatpush.msra.mxu0 0.0
    %304 = vmatpush.msra.mxu0 0.0
    %305 = vmatpush.msra.mxu0 0.0
    %306 = vmatpush.msra.mxu0 0.0
    %307 = vmatpush.msra.mxu0 0.0
    %308 = vmatpush.msra.mxu0 0.0
    %309 = vmatpush.msra.mxu0 0.0
    %310 = vmatpush.msra.mxu0 0.0
    %311 = vmatpush.msra.mxu0 0.0
    %312 = vmatpush.msra.mxu0 0.0
    %313 = vmatpush.msra.mxu0 0.0
    %314 = vmatpush.msra.mxu0 %v51
    %315 = vmatpush.msra.mxu0 %v50
    %316 = vmatpush.msra.mxu0 %v49
    %317 = vmatpush.msra.mxu0 %v48
    %318 = vmatmul.f32.gmra.mxu0 %v300
    %v319 = vpop.f32.mrf.mxu0
    %v320 = vadd.f32 0.0, %v319
    %321 = vdwg.mxu0
    %v323 = vsel %vm159, %v296, 0
    %325 = vmatpush.msra.mxu0 0.0
    %326 = vmatpush.msra.mxu0 0.0
    %327 = vmatpush.msra.mxu0 0.0
    %328 = vmatpush.msra.mxu0 0.0
    %329 = vmatpush.msra.mxu0 0.0
    %330 = vmatpush.msra.mxu0 0.0
    %331 = vmatpush.msra.mxu0 0.0
    %332 = vmatpush.msra.mxu0 0.0
    %333 = vmatpush.msra.mxu0 0.0
    %334 = vmatpush.msra.mxu0 0.0
    %335 = vmatpush.msra.mxu0 0.0
    %336 = vmatpush.msra.mxu0 0.0
    %337 = vmatpush.msra.mxu0 %v55
    %338 = vmatpush.msra.mxu0 %v54
    %339 = vmatpush.msra.mxu0 %v53
    %340 = vmatpush.msra.mxu0 %v52
    %341 = vmatmul.f32.gmra.mxu0 %v323
    %v342 = vpop.f32.mrf.mxu0
    %v343 = vadd.f32 0.0, %v342
    %344 = vdwg.mxu0
    %v346 = vsel %vm92, %v320, 0
    %v349 = vsel %vm92, %v343, 0
    %351 = vmatpush.msra.mxu0 0.0
    %352 = vmatpush.msra.mxu0 0.0
    %353 = vmatpush.msra.mxu0 0.0
    %354 = vmatpush.msra.mxu0 0.0
    %355 = vmatpush.msra.mxu0 0.0
    %356 = vmatpush.msra.mxu0 0.0
    %357 = vmatpush.msra.mxu0 0.0
    %358 = vmatpush.msra.mxu0 0.0
    %359 = vmatpush.msra.mxu0 0.0
    %360 = vmatpush.msra.mxu0 0.0
    %361 = vmatpush.msra.mxu0 0.0
    %362 = vmatpush.msra.mxu0 0.0
    %363 = vmatpush.msra.mxu0 0.0
    %364 = vmatpush.msra.mxu0 0.0
    %365 = vmatpush.msra.mxu0 %v120
    %366 = vmatpush.msra.mxu0 %v117
    %367 = vmatmul.f32.gmra.mxu0 %v346
    %v368 = vpop.f32.mrf.mxu0
    %v369 = vadd.f32 0.0, %v368
    %370 = vmatmul.f32.gmra.mxu0 %v349
    %v371 = vpop.f32.mrf.mxu0
    %v372 = vadd.f32 0.0, %v371
    %373 = vdwg.mxu0
    %v374 = vsub.f32 %v152, %v369
    %v375 = vsub.f32 %v155, %v372
    %v376 = vstv %s297
    %v377 = vmul.f32 %v376, %v374
    %v378 = vmul.f32 %v376, %v375
    %v380 = vsel %vm92, %v377, 0
    %382 = vmatpush.msra.mxu0 0.0
    %383 = vmatpush.msra.mxu0 0.0
    %384 = vmatpush.msra.mxu0 0.0
    %385 = vmatpush.msra.mxu0 0.0
    %386 = vmatpush.msra.mxu0 0.0
    %387 = vmatpush.msra.mxu0 0.0
    %388 = vmatpush.msra.mxu0 0.0
    %389 = vmatpush.msra.mxu0 0.0
    %390 = vmatpush.msra.mxu0 0.0
    %391 = vmatpush.msra.mxu0 0.0
    %392 = vmatpush.msra.mxu0 0.0
    %393 = vmatpush.msra.mxu0 0.0
    %394 = vmatpush.msra.mxu0 0.0
    %395 = vmatpush.msra.mxu0 0.0
    %396 = vmatpush.msra.mxu0 %v45
    %397 = vmatpush.msra.mxu0 %v44
    %398 = vmatmul.f32.gmra.mxu0 %v380
    %v399 = vpop.f32.mrf.mxu0
    %v400 = vadd.f32 0.0, %v399
    %401 = vdwg.mxu0
    %v403 = vsel %vm92, %v378, 0
    %405 = vmatpush.msra.mxu0 0.0
    %406 = vmatpush.msra.mxu0 0.0
    %407 = vmatpush.msra.mxu0 0.0
    %408 = vmatpush.msra.mxu0 0.0
    %409 = vmatpush.msra.mxu0 0.0
    %410 = vmatpush.msra.mxu0 0.0
    %411 = vmatpush.msra.mxu0 0.0
    %412 = vmatpush.msra.mxu0 0.0
    %413 = vmatpush.msra.mxu0 0.0
    %414 = vmatpush.msra.mxu0 0.0
    %415 = vmatpush.msra.mxu0 0.0
    %416 = vmatpush.msra.mxu0 0.0
    %417 = vmatpush.msra.mxu0 0.0
    %418 = vmatpush.msra.mxu0 0.0
    %419 = vmatpush.msra.mxu0 %v47
    %420 = vmatpush.msra.mxu0 %v46
    %421 = vmatmul.f32.gmra.mxu0 %v403
    %v422 = vpop.f32.mrf.mxu0
    %v423 = vadd.f32 0.0, %v422
    %424 = vdwg.mxu0
    %v425 = vadd.f32 %v295, %v400
    %v426 = vadd.f32 %v296, %v423
    %s427 = ssub.f32 0.0, %s298
    %v428 = vstv %s427
    %v429 = vmax.f32 %v428, %v425
    %v430 = vmax.f32 %v428, %v426
    %v431 = vstv %s298
    %v432 = vmin.f32 %v431, %v429
    %v433 = vmin.f32 %v431, %v430
    %v434 = vsub.f32 %v425, %v432
    %v435 = vsub.f32 %v426, %v433
    %s436 = sld [smem:[#allocation2 + $0x4]]
    %s437 = sld [smem:[#allocation2 + $0x5]]
    %v439 = vsel %vm159, %v434, 0
    %441 = vmatpush.msra.mxu0 0.0
    %442 = vmatpush.msra.mxu0 0.0
    %443 = vmatpush.msra.mxu0 0.0
    %444 = vmatpush.msra.mxu0 0.0
    %445 = vmatpush.msra.mxu0 0.0
    %446 = vmatpush.msra.mxu0 0.0
    %447 = vmatpush.msra.mxu0 0.0
    %448 = vmatpush.msra.mxu0 0.0
    %449 = vmatpush.msra.mxu0 0.0
    %450 = vmatpush.msra.mxu0 0.0
    %451 = vmatpush.msra.mxu0 0.0
    %452 = vmatpush.msra.mxu0 0.0
    %453 = vmatpush.msra.mxu0 %v51
    %454 = vmatpush.msra.mxu0 %v50
    %455 = vmatpush.msra.mxu0 %v49
    %456 = vmatpush.msra.mxu0 %v48
    %457 = vmatmul.f32.gmra.mxu0 %v439
    %v458 = vpop.f32.mrf.mxu0
    %v459 = vadd.f32 0.0, %v458
    %460 = vdwg.mxu0
    %v462 = vsel %vm159, %v435, 0
    %464 = vmatpush.msra.mxu0 0.0
    %465 = vmatpush.msra.mxu0 0.0
    %466 = vmatpush.msra.mxu0 0.0
    %467 = vmatpush.msra.mxu0 0.0
    %468 = vmatpush.msra.mxu0 0.0
    %469 = vmatpush.msra.mxu0 0.0
    %470 = vmatpush.msra.mxu0 0.0
    %471 = vmatpush.msra.mxu0 0.0
    %472 = vmatpush.msra.mxu0 0.0
    %473 = vmatpush.msra.mxu0 0.0
    %474 = vmatpush.msra.mxu0 0.0
    %475 = vmatpush.msra.mxu0 0.0
    %476 = vmatpush.msra.mxu0 %v55
    %477 = vmatpush.msra.mxu0 %v54
    %478 = vmatpush.msra.mxu0 %v53
    %479 = vmatpush.msra.mxu0 %v52
    %480 = vmatmul.f32.gmra.mxu0 %v462
    %v481 = vpop.f32.mrf.mxu0
    %v482 = vadd.f32 0.0, %v481
    %483 = vdwg.mxu0
    %v485 = vsel %vm92, %v459, 0
    %v488 = vsel %vm92, %v482, 0
    %490 = vmatpush.msra.mxu0 0.0
    %491 = vmatpush.msra.mxu0 0.0
    %492 = vmatpush.msra.mxu0 0.0
    %493 = vmatpush.msra.mxu0 0.0
    %494 = vmatpush.msra.mxu0 0.0
    %495 = vmatpush.msra.mxu0 0.0
    %496 = vmatpush.msra.mxu0 0.0
    %497 = vmatpush.msra.mxu0 0.0
    %498 = vmatpush.msra.mxu0 0.0
    %499 = vmatpush.msra.mxu0 0.0
    %500 = vmatpush.msra.mxu0 0.0
    %501 = vmatpush.msra.mxu0 0.0
    %502 = vmatpush.msra.mxu0 0.0
    %503 = vmatpush.msra.mxu0 0.0
    %504 = vmatpush.msra.mxu0 %v120
    %505 = vmatpush.msra.mxu0 %v117
    %506 = vmatmul.f32.gmra.mxu0 %v485
    %v507 = vpop.f32.mrf.mxu0
    %v508 = vadd.f32 0.0, %v507
    %509 = vmatmul.f32.gmra.mxu0 %v488
    %v510 = vpop.f32.mrf.mxu0
    %v511 = vadd.f32 0.0, %v510
    %512 = vdwg.mxu0
    %v513 = vsub.f32 %v152, %v508
    %v514 = vsub.f32 %v155, %v511
    %v515 = vstv %s436
    %v516 = vmul.f32 %v515, %v513
    %v517 = vmul.f32 %v515, %v514
    %v519 = vsel %vm92, %v516, 0
    %521 = vmatpush.msra.mxu0 0.0
    %522 = vmatpush.msra.mxu0 0.0
    %523 = vmatpush.msra.mxu0 0.0
    %524 = vmatpush.msra.mxu0 0.0
    %525 = vmatpush.msra.mxu0 0.0
    %526 = vmatpush.msra.mxu0 0.0
    %527 = vmatpush.msra.mxu0 0.0
    %528 = vmatpush.msra.mxu0 0.0
    %529 = vmatpush.msra.mxu0 0.0
    %530 = vmatpush.msra.mxu0 0.0
    %531 = vmatpush.msra.mxu0 0.0
    %532 = vmatpush.msra.mxu0 0.0
    %533 = vmatpush.msra.mxu0 0.0
    %534 = vmatpush.msra.mxu0 0.0
    %535 = vmatpush.msra.mxu0 %v45
    %536 = vmatpush.msra.mxu0 %v44
    %537 = vmatmul.f32.gmra.mxu0 %v519
    %v538 = vpop.f32.mrf.mxu0
    %v539 = vadd.f32 0.0, %v538
    %540 = vdwg.mxu0
    %v542 = vsel %vm92, %v517, 0
    %544 = vmatpush.msra.mxu0 0.0
    %545 = vmatpush.msra.mxu0 0.0
    %546 = vmatpush.msra.mxu0 0.0
    %547 = vmatpush.msra.mxu0 0.0
    %548 = vmatpush.msra.mxu0 0.0
    %549 = vmatpush.msra.mxu0 0.0
    %550 = vmatpush.msra.mxu0 0.0
    %551 = vmatpush.msra.mxu0 0.0
    %552 = vmatpush.msra.mxu0 0.0
    %553 = vmatpush.msra.mxu0 0.0
    %554 = vmatpush.msra.mxu0 0.0
    %555 = vmatpush.msra.mxu0 0.0
    %556 = vmatpush.msra.mxu0 0.0
    %557 = vmatpush.msra.mxu0 0.0
    %558 = vmatpush.msra.mxu0 %v47
    %559 = vmatpush.msra.mxu0 %v46
    %560 = vmatmul.f32.gmra.mxu0 %v542
    %v561 = vpop.f32.mrf.mxu0
    %v562 = vadd.f32 0.0, %v561
    %563 = vdwg.mxu0
    %v564 = vadd.f32 %v434, %v539
    %v565 = vadd.f32 %v435, %v562
    %s566 = ssub.f32 0.0, %s437
    %v567 = vstv %s566
    %v568 = vmax.f32 %v567, %v564
    %v569 = vmax.f32 %v567, %v565
    %v570 = vstv %s437
    %v571 = vmin.f32 %v570, %v568
    %v572 = vmin.f32 %v570, %v569
    %v573 = vsub.f32 %v564, %v571
    %v574 = vsub.f32 %v565, %v572
    %575 = vst.msk [vmem:[#allocation5] sm:$0xff] %vm159, %v573
    %576 = vst.msk [vmem:[#allocation5 + $0x8] sm:$0xff] %vm159, %v574
    // Predicated region
    $region34: #{tpu_custom_call.1} parent=1 // pred_check
      _
    $region35: #{tpu_custom_call.1} parent=1 // pred_check_branch
      %578 = sbr.rel (0) target = $region37
    $region36: #{tpu_custom_call.1} parent=1 // pred_region
      %580 = vsyncadd [#allocation3], 0
      %s581 = sshll.u32 [#allocation5], 4
      %s582 = int_to_ptr.vmem [resolvable:$true] %s581
      %s583 = sshll.u32 %s7, 4
      %s584 = int_to_ptr.hbm [resolvable:$true] %s583
      %589 = dma.vmem_to_hbm [thread:$0]  %s582, 256, %s584, [#allocation3], 128, 128, 8
    $region37: #{tpu_custom_call.1} parent=1 // pred_fallthru
      _
    // Predicated region
    $region38: #{tpu_custom_call.1} parent=1 // pred_check
      _
    $region39: #{tpu_custom_call.1} parent=1 // pred_check_branch
      %591 = sbr.rel (0) target = $region41
    $region40: #{tpu_custom_call.1} parent=1 // pred_region
      %593 = dma.done [#allocation3], 256
    $region41: #{tpu_custom_call.1} parent=1 // pred_fallthru
      _
    %594 = vsyncpa [#allocation3], 1
    %595 = vsyncpa [#allocation4], 1

</llo_original>
